<compile_context>
chip_gen: v7x
topology: tpu7x:2x2x1
jax: 0.10.0
libtpu: 0.0.40
codegen_flags: <defaults>
</compile_context>

<pallas_src>
import jax
import jax.numpy as jnp
from jax.experimental import pallas as pl
from jax.experimental.pallas import tpu as pltpu


def _round_up(n, m):
    return ((n + m - 1) // m) * m


def _vmem_budget_bytes():
    """~75% of physical VMEM (v7x: 48 MiB, v5e/v6e: 96 MiB); safe fallback 48 MiB."""
    try:
        cap = int(pltpu.get_tpu_info().vmem_capacity_bytes)
    except Exception:
        cap = 64 << 20
    return (cap * 3) // 4


def _pick_batch_tile(B, P, C, H_pad, O_pad, mm_bytes, act_bytes, out_bytes,
                     vmem_budget, n_act_buf, single_buffer_weights, block_b):
    """Largest multiple-of-8 batch tile that fits the VMEM budget.

    Budget = resident weights (single- or double-buffered)
           + n_act_buf * streaming input tile
           + 2 * output tile
           + intermediates (h in f32, h cast to matmul dtype, logits in f32).
    """
    wbuf = 1 if single_buffer_weights else 2
    weight_bytes = wbuf * (((P + C) * H_pad + H_pad * O_pad) * mm_bytes
                           + (H_pad + O_pad) * 4)
    per_row = (n_act_buf * (P + C) * act_bytes
               + 2 * O_pad * out_bytes
               + H_pad * 4 + H_pad * mm_bytes + O_pad * 4)
    avail = max(vmem_budget - weight_bytes, 1 << 20)
    tb_budget = max(8, (avail // per_row) // 8 * 8)
    # Ensure >= 2 grid tiles (when possible) so v7x's second TensorCore gets work.
    tb_two_tiles = _round_up(-(-B // 2), 8) if B > 8 else 8
    tb = min(tb_budget, block_b, tb_two_tiles, _round_up(B, 8))
    return max(8, (tb // 8) * 8)


def _baseline_mlp_kernel(prev_ref, x_ref, w1p_ref, w1x_ref, b1_ref, w2_ref, b2_ref,
                         out_ref):
    """Fused (split-concat) 2-layer MLP + LogSoftmax for one batch tile.

    prev_ref : (TB, P)         previous_predictions tile (f32, cast in-kernel)
    x_ref    : (TB, C)         cnn-feature tile          (f32, cast in-kernel)
    w1p_ref  : (P, H_pad)      top rows of W1   (matmul dtype, zero-padded cols)
    w1x_ref  : (C, H_pad)      bottom rows of W1
    b1_ref   : (1, H_pad)      zero-padded bias (f32)
    w2_ref   : (H_pad, O_pad)  zero-padded W2
    b2_ref   : (1, O_pad)      bias; padded lanes = -1e30 (f32)
    out_ref  : (TB, O_pad)     log-probabilities (real lanes [:O])
    """
    mm_dtype = w1p_ref.dtype

    # fc1: fused concat via split matmul, f32 accumulation on the MXU.
    h = jnp.dot(prev_ref[...].astype(mm_dtype), w1p_ref[...],
                preferred_element_type=jnp.float32)
    h = h + jnp.dot(x_ref[...].astype(mm_dtype), w1x_ref[...],
                    preferred_element_type=jnp.float32)
    h = jnp.maximum(h + b1_ref[...], 0.0)                   # bias + ReLU in f32

    # fc2 (logits). Padded h columns are 0 and padded W2 rows are 0, so padded
    # logit lanes equal b2_pad = -1e30 exactly.
    logits = jnp.dot(h.astype(w2_ref.dtype), w2_ref[...],
                     preferred_element_type=jnp.float32) + b2_ref[...]

    # LogSoftmax over the lane axis (f32): exp(-1e30 - m) == 0, so padded lanes
    # do not perturb the normalizer.
    m = jnp.max(logits, axis=-1, keepdims=True)
    shifted = logits - m
    lse = jnp.log(jnp.sum(jnp.exp(shifted), axis=-1, keepdims=True))
    out_ref[...] = (shifted - lse).astype(out_ref.dtype)


def prepare_params(params, *, matmul_dtype=jnp.bfloat16, previous_predictions_size=None):
    """One-time packing: split W1 at the concat boundary, pad H/O to 128 lanes."""
    w1, b1, w2, b2 = params["w1"], params["b1"], params["w2"], params["b2"]
    H = w1.shape[1]
    O = w2.shape[1]
    P = 2 * O if previous_predictions_size is None else previous_predictions_size
    C = w1.shape[0] - P
    H_pad = _round_up(H, 128)
    O_pad = _round_up(O, 128)

    w1_prev = jnp.zeros((P, H_pad), matmul_dtype).at[:, :H].set(
        w1[:P].astype(matmul_dtype))
    w1_x = jnp.zeros((C, H_pad), matmul_dtype).at[:, :H].set(
        w1[P:].astype(matmul_dtype))
    b1_p = jnp.zeros((1, H_pad), jnp.float32).at[:, :H].set(
        b1.astype(jnp.float32)[None, :])
    w2_p = jnp.zeros((H_pad, O_pad), matmul_dtype).at[:H, :O].set(
        w2.astype(matmul_dtype))
    # Padded output lanes get a huge negative f32 bias so log-softmax ignores them.
    b2_p = jnp.full((1, O_pad), -1e30, jnp.float32).at[:, :O].set(
        b2.astype(jnp.float32)[None, :])

    return {
        "w1_prev": w1_prev, "w1_x": w1_x, "b1": b1_p, "w2": w2_p, "b2": b2_p,
        "P": P, "C": C, "H": H, "O": O,
    }


def baseline_mlp_forward(x, previous_predictions, prepared, *, block_b=1024,
                         out_dtype=jnp.float32, return_padded=False):
    """Baseline_MLP.forward for task='classification', contrastive=False.

    x                     : (B, cnn_flattened_size)
    previous_predictions  : (B, output_size * 2)
    prepared              : output of prepare_params()
    """
    P, C, O = prepared["P"], prepared["C"], prepared["O"]
    w1_prev, w1_x = prepared["w1_prev"], prepared["w1_x"]
    b1, w2, b2 = prepared["b1"], prepared["w2"], prepared["b2"]

    B = x.shape[0]
    assert x.shape == (B, C), (x.shape, (B, C))
    assert previous_predictions.shape == (B, P), (previous_predictions.shape, (B, P))

    H_pad = w1_prev.shape[1]
    O_pad = w2.shape[1]
    mm_bytes = jnp.dtype(w1_prev.dtype).itemsize
    act_bytes = jnp.dtype(x.dtype).itemsize
    out_bytes = jnp.dtype(out_dtype).itemsize

    vmem_budget = _vmem_budget_bytes()
    # Extra streaming depth only when per-tile compute is short (small hidden).
    n_act_buf = 3 if H_pad <= 512 else 2

    TB = _pick_batch_tile(B, P, C, H_pad, O_pad, mm_bytes, act_bytes, out_bytes,
                          vmem_budget, n_act_buf,
                          single_buffer_weights=True, block_b=block_b)
    grid = (int(pl.cdiv(B, TB)),)   # partial last tile is fine: op is row-wise

    def call(use_pipeline_mode):
        if use_pipeline_mode:
            stream_kw = dict(pipeline_mode=pl.Buffered(n_act_buf))
            resident_kw = dict(pipeline_mode=pl.Buffered(1))
        else:
            stream_kw, resident_kw = {}, {}
        in_specs = [
            pl.BlockSpec((TB, P), lambda i: (i, 0), **stream_kw),         # prev tile
            pl.BlockSpec((TB, C), lambda i: (i, 0), **stream_kw),         # x tile
            pl.BlockSpec((P, H_pad), lambda i: (0, 0), **resident_kw),    # W1[:P]
            pl.BlockSpec((C, H_pad), lambda i: (0, 0), **resident_kw),    # W1[P:]
            pl.BlockSpec((1, H_pad), lambda i: (0, 0), **resident_kw),    # b1
            pl.BlockSpec((H_pad, O_pad), lambda i: (0, 0), **resident_kw),  # W2
            pl.BlockSpec((1, O_pad), lambda i: (0, 0), **resident_kw),    # b2
        ]
        fn = pl.pallas_call(
            _baseline_mlp_kernel,
            out_shape=jax.ShapeDtypeStruct((B, O_pad), out_dtype),
            grid_spec=pltpu.PrefetchScalarGridSpec(
                num_scalar_prefetch=0,
                grid=grid,
                in_specs=in_specs,
                out_specs=pl.BlockSpec((TB, O_pad), lambda i: (i, 0)),
            ),
            compiler_params=pltpu.CompilerParams(
                dimension_semantics=("parallel",),   # shard batch tiles across TCs (v7x)
                vmem_limit_bytes=int(vmem_budget),
            ),
        )
        return fn(previous_predictions, x, w1_prev, w1_x, b1, w2, b2)

    try:
        out = call(True)
    except Exception:
        # Fallback for JAX versions without BlockSpec(pipeline_mode=pl.Buffered(n)).
        out = call(False)

    if return_padded:
        return out          # (B, O_pad) lane-dense slab; real lanes are [:, :O]
    return out[:, :O]


def init_params(key, cnn_flattened_size, hidden_size, output_size):
    prev_size = output_size * 2
    d_in = prev_size + cnn_flattened_size
    k1, k2, k3, k4 = jax.random.split(key, 4)
    scale1 = 1.0 / jnp.sqrt(d_in)
    scale2 = 1.0 / jnp.sqrt(hidden_size)
    return {
        "w1": jax.random.uniform(k1, (d_in, hidden_size), jnp.float32, -scale1, scale1),
        "b1": jax.random.uniform(k2, (hidden_size,), jnp.float32, -scale1, scale1),
        "w2": jax.random.uniform(k3, (hidden_size, output_size), jnp.float32, -scale2, scale2),
        "b2": jax.random.uniform(k4, (output_size,), jnp.float32, -scale2, scale2),
    }


def reference_forward(x, previous_predictions, params):
    xc = jnp.concatenate([previous_predictions, x], axis=1)
    h = jnp.maximum(xc @ params["w1"] + params["b1"], 0.0)
    logits = h @ params["w2"] + params["b2"]
    return jax.nn.log_softmax(logits, axis=1)


if __name__ == "__main__":
    # Small, module-consistent shapes. batch=10 deliberately exercises the
    # partial-last-tile path (TB=8, grid=2).
    batch = 10
    cnn_flattened_size = 128
    hidden_size = 64
    output_size = 16          # previous_predictions_size = 2 * output_size = 32

    key = jax.random.PRNGKey(0)
    kp, kx, kprev = jax.random.split(key, 3)

    params = init_params(kp, cnn_flattened_size, hidden_size, output_size)
    x = jax.random.normal(kx, (batch, cnn_flattened_size), jnp.float32)
    previous_predictions = jax.random.normal(
        kprev, (batch, 2 * output_size), jnp.float32
    )

    ref = reference_forward(x, previous_predictions, params)

    # Default path: bf16 MXU operands, f32 accumulation / softmax.
    prepared_bf16 = prepare_params(params)                       # bf16 default
    out_bf16 = jax.block_until_ready(
        baseline_mlp_forward(x, previous_predictions, prepared_bf16))
    assert out_bf16.shape == (batch, output_size)
    assert jnp.allclose(out_bf16, ref, atol=5e-2, rtol=5e-2), \
        "bf16-path mismatch vs JAX reference"

    # Full-precision path: exact check.
    prepared_f32 = prepare_params(params, matmul_dtype=jnp.float32)
    out_f32 = jax.block_until_ready(
        baseline_mlp_forward(x, previous_predictions, prepared_f32))
    assert out_f32.shape == (batch, output_size)
    assert jnp.allclose(out_f32, ref, atol=1e-4, rtol=1e-4), \
        "f32-path mismatch vs JAX reference"

    print("KERNEL_OK")
</pallas_src>

<mosaic_0001>
module attributes {stable_mosaic.version = 11 : i64} {
  func.func @_baseline_mlp_kernel(%arg0: i32, %arg1: memref<8x32xf32, #tpu.memory_space<vmem>>, %arg2: memref<8x128xf32, #tpu.memory_space<vmem>>, %arg3: memref<32x128xbf16, #tpu.memory_space<vmem>>, %arg4: memref<128x128xbf16, #tpu.memory_space<vmem>>, %arg5: memref<1x128xf32, #tpu.memory_space<vmem>>, %arg6: memref<128x128xbf16, #tpu.memory_space<vmem>>, %arg7: memref<1x128xf32, #tpu.memory_space<vmem>>, %arg8: memref<8x128xf32, #tpu.memory_space<vmem>>) attributes {dimension_semantics = [#tpu.dimension_semantics<parallel>], iteration_bounds = array<i64: 2>, scalar_prefetch = 0 : i64, scratch_operands = 0 : i64, tpu.core_type = #tpu.core_type<tc>, window_params = [{transform_indices = @transform_0, window_bounds = array<i64: 8, 32>}, {transform_indices = @transform_1, window_bounds = array<i64: 8, 128>}, {pipeline_mode = #tpu.pipeline_mode<synchronous>, transform_indices = @transform_2, window_bounds = array<i64: 32, 128>}, {pipeline_mode = #tpu.pipeline_mode<synchronous>, transform_indices = @transform_3, window_bounds = array<i64: 128, 128>}, {pipeline_mode = #tpu.pipeline_mode<synchronous>, transform_indices = @transform_4, window_bounds = array<i64: 1, 128>}, {pipeline_mode = #tpu.pipeline_mode<synchronous>, transform_indices = @transform_5, window_bounds = array<i64: 128, 128>}, {pipeline_mode = #tpu.pipeline_mode<synchronous>, transform_indices = @transform_6, window_bounds = array<i64: 1, 128>}, {transform_indices = @transform_7, window_bounds = array<i64: 8, 128>}]} {
    %c0 = arith.constant 0 : index
    %c0_0 = arith.constant 0 : index
    %0 = vector.load %arg1[%c0, %c0_0] : memref<8x32xf32, #tpu.memory_space<vmem>>, vector<8x32xf32>
    %1 = arith.truncf %0 : vector<8x32xf32> to vector<8x32xbf16>
    %c0_1 = arith.constant 0 : index
    %c0_2 = arith.constant 0 : index
    %2 = vector.load %arg3[%c0_1, %c0_2] : memref<32x128xbf16, #tpu.memory_space<vmem>>, vector<32x128xbf16>
    %cst = arith.constant dense<0.000000e+00> : vector<8x128xf32>
    %3 = tpu.matmul %1, %2, %cst {dimension_numbers = #tpu.dot_dimension_numbers<[1], [0], [0], [1], [0, 0, 1, 1], [], []>} : vector<8x32xbf16>, vector<32x128xbf16>, vector<8x128xf32> -> vector<8x128xf32>
    %c0_3 = arith.constant 0 : index
    %c0_4 = arith.constant 0 : index
    %4 = vector.load %arg2[%c0_3, %c0_4] : memref<8x128xf32, #tpu.memory_space<vmem>>, vector<8x128xf32>
    %5 = arith.truncf %4 : vector<8x128xf32> to vector<8x128xbf16>
    %c0_5 = arith.constant 0 : index
    %c0_6 = arith.constant 0 : index
    %6 = vector.load %arg4[%c0_5, %c0_6] : memref<128x128xbf16, #tpu.memory_space<vmem>>, vector<128x128xbf16>
    %cst_7 = arith.constant dense<0.000000e+00> : vector<8x128xf32>
    %7 = tpu.matmul %5, %6, %cst_7 {dimension_numbers = #tpu.dot_dimension_numbers<[1], [0], [0], [1], [0, 0, 1, 1], [], []>} : vector<8x128xbf16>, vector<128x128xbf16>, vector<8x128xf32> -> vector<8x128xf32>
    %8 = arith.addf %3, %7 : vector<8x128xf32>
    %c0_8 = arith.constant 0 : index
    %c0_9 = arith.constant 0 : index
    %9 = vector.load %arg5[%c0_8, %c0_9] : memref<1x128xf32, #tpu.memory_space<vmem>>, vector<1x128xf32>
    %10 = vector.broadcast %9 : vector<1x128xf32> to vector<8x128xf32>
    %11 = arith.addf %8, %10 : vector<8x128xf32>
    %cst_10 = arith.constant 0.000000e+00 : f32
    %12 = vector.broadcast %cst_10 : f32 to vector<8x128xf32>
    %13 = arith.maximumf %11, %12 : vector<8x128xf32>
    %14 = arith.truncf %13 : vector<8x128xf32> to vector<8x128xbf16>
    %c0_11 = arith.constant 0 : index
    %c0_12 = arith.constant 0 : index
    %15 = vector.load %arg6[%c0_11, %c0_12] : memref<128x128xbf16, #tpu.memory_space<vmem>>, vector<128x128xbf16>
    %cst_13 = arith.constant dense<0.000000e+00> : vector<8x128xf32>
    %16 = tpu.matmul %14, %15, %cst_13 {dimension_numbers = #tpu.dot_dimension_numbers<[1], [0], [0], [1], [0, 0, 1, 1], [], []>} : vector<8x128xbf16>, vector<128x128xbf16>, vector<8x128xf32> -> vector<8x128xf32>
    %c0_14 = arith.constant 0 : index
    %c0_15 = arith.constant 0 : index
    %17 = vector.load %arg7[%c0_14, %c0_15] : memref<1x128xf32, #tpu.memory_space<vmem>>, vector<1x128xf32>
    %18 = vector.broadcast %17 : vector<1x128xf32> to vector<8x128xf32>
    %19 = arith.addf %16, %18 : vector<8x128xf32>
    %cst_16 = arith.constant dense<0xFF800000> : vector<8xf32>
    %20 = vector.multi_reduction <maximumf>, %19, %cst_16 [1] : vector<8x128xf32> to vector<8xf32>
    %21 = vector.shape_cast %20 : vector<8xf32> to vector<8x1xf32>
    %22 = vector.broadcast %21 : vector<8x1xf32> to vector<8x128xf32>
    %23 = arith.subf %19, %22 : vector<8x128xf32>
    %24 = math.exp %23 : vector<8x128xf32>
    %cst_17 = arith.constant dense<0.000000e+00> : vector<8xf32>
    %25 = vector.multi_reduction <add>, %24, %cst_17 [1] : vector<8x128xf32> to vector<8xf32>
    %26 = vector.shape_cast %25 : vector<8xf32> to vector<8x1xf32>
    %27 = math.log %26 : vector<8x1xf32>
    %28 = vector.broadcast %27 : vector<8x1xf32> to vector<8x128xf32>
    %29 = arith.subf %23, %28 : vector<8x128xf32>
    %c0_18 = arith.constant 0 : index
    %c0_19 = arith.constant 0 : index
    %30 = vector.load %arg8[%c0_18, %c0_19] : memref<8x128xf32, #tpu.memory_space<vmem>>, vector<8x128xf32>
    tpu.vector_store %arg8[%c0_18, %c0_19], %29 {strides = array<i32>} : memref<8x128xf32, #tpu.memory_space<vmem>>, vector<8x128xf32>,
    return
  }
  func.func @transform_0(%arg0: i32) -> (i32, i32) {
    %c0_i32 = arith.constant 0 : i32
    %c0_i32_0 = arith.constant 0 : i32
    return %arg0, %c0_i32 : i32, i32
  }
  func.func @transform_1(%arg0: i32) -> (i32, i32) {
    %c0_i32 = arith.constant 0 : i32
    %c0_i32_0 = arith.constant 0 : i32
    return %arg0, %c0_i32 : i32, i32
  }
  func.func @transform_2(%arg0: i32) -> (i32, i32) {
    %c0_i32 = arith.constant 0 : i32
    %c0_i32_0 = arith.constant 0 : i32
    %c0_i32_1 = arith.constant 0 : i32
    return %c0_i32, %c0_i32_0 : i32, i32
  }
  func.func @transform_3(%arg0: i32) -> (i32, i32) {
    %c0_i32 = arith.constant 0 : i32
    %c0_i32_0 = arith.constant 0 : i32
    %c0_i32_1 = arith.constant 0 : i32
    return %c0_i32, %c0_i32_0 : i32, i32
  }
  func.func @transform_4(%arg0: i32) -> (i32, i32) {
    %c0_i32 = arith.constant 0 : i32
    %c0_i32_0 = arith.constant 0 : i32
    %c0_i32_1 = arith.constant 0 : i32
    return %c0_i32, %c0_i32_0 : i32, i32
  }
  func.func @transform_5(%arg0: i32) -> (i32, i32) {
    %c0_i32 = arith.constant 0 : i32
    %c0_i32_0 = arith.constant 0 : i32
    %c0_i32_1 = arith.constant 0 : i32
    return %c0_i32, %c0_i32_0 : i32, i32
  }
  func.func @transform_6(%arg0: i32) -> (i32, i32) {
    %c0_i32 = arith.constant 0 : i32
    %c0_i32_0 = arith.constant 0 : i32
    %c0_i32_1 = arith.constant 0 : i32
    return %c0_i32, %c0_i32_0 : i32, i32
  }
  func.func @transform_7(%arg0: i32) -> (i32, i32) {
    %c0_i32 = arith.constant 0 : i32
    %c0_i32_0 = arith.constant 0 : i32
    return %arg0, %c0_i32 : i32, i32
  }
}

</mosaic_0001>

<llo_original>
// kernel: tpu_custom_call.1
$region0: #{tpu_custom_call.1}
  #allocation0 [shape = 'u32[]', space=smem, size = 0x4, offset = 0x4, fixed_abs, tag = 'smem constant byte address 0x4 - core index']
  #allocation1 [shape = 'u32[144,128]{1,0:T(1,128)}', space=vmem, size = 0x12000, scoped, tag = 'internal scratch']
  %s0 = inlined_call_operand.hbm [shape: f32[10,32], index: 0, kind: input, shape index: {}]
  %s1 = inlined_call_operand.hbm [shape: f32[10,128], index: 1, kind: input, shape index: {}]
  %s2 = inlined_call_operand.hbm [shape: bf16[32,128], index: 2, kind: input, shape index: {}]
  %s3 = inlined_call_operand.hbm [shape: bf16[128,128], index: 3, kind: input, shape index: {}]
  %s4 = inlined_call_operand.vmem [shape: f32[1,128], index: 4, kind: input, shape index: {}]
  %s5 = inlined_call_operand.hbm [shape: bf16[128,128], index: 5, kind: input, shape index: {}]
  %s6 = inlined_call_operand.vmem [shape: f32[1,128], index: 6, kind: input, shape index: {}]
  %s7 = inlined_call_operand.hbm [shape: f32[10,128], index: 7, kind: output, shape index: {}]
  %s8 = sld [smem:[#allocation0]]
  $region81: #{tpu_custom_call.1} parent=0
    _
  %s10 = ssub.s32 1, %s8
  %s11 = scalar_select 0, %s10, %s8
  $region1: #{tpu_custom_call.1} parent=0
    #allocation2 [shape = 'u8[8192]{0}', space=vmem, size = 0x2000, scoped, tag = 'input window, operand 0']
    #allocation3 [shape = 's32[2]{0}', space=sflag, size = 0x8, scoped, tag = 'scoped memory for tpu_custom_call.1']
    #allocation4 [shape = 's32[2]{0}', space=sflag, size = 0x8, scoped, tag = 'scoped memory for tpu_custom_call.1']
    #allocation5 [shape = 'u8[8192]{0}', space=vmem, size = 0x2000, scoped, tag = 'input window, operand 1']
    #allocation6 [shape = 's32[2]{0}', space=sflag, size = 0x8, scoped, tag = 'scoped memory for tpu_custom_call.1']
    #allocation7 [shape = 'u8[8192]{0}', space=vmem, size = 0x2000, scoped, tag = 'input window, operand 2, single buffered']
    #allocation8 [shape = 'u8[32768]{0}', space=vmem, size = 0x8000, scoped, tag = 'input window, operand 3, single buffered']
    #allocation9 [shape = 's32[1]{0}', space=sflag, size = 0x4, scoped, tag = 'scoped memory for tpu_custom_call.1']
    #allocation10 [shape = 'u8[32768]{0}', space=vmem, size = 0x8000, scoped, tag = 'input window, operand 5, single buffered']
    #allocation11 [shape = 'u8[8192]{0}', space=vmem, size = 0x2000, scoped, tag = 'output window, operand 0']
    %12 = vsyncpa [#allocation3], 0
    %s13 = scalar_lea.sflag [#allocation3], 1
    %14 = vsyncpa %s13, 0
    %15 = vsyncpa [#allocation6], 0
    %s16 = scalar_lea.sflag [#allocation6], 1
    %17 = vsyncpa %s16, 0
    %18 = vsyncpa [#allocation9], 0
    %19 = vsyncpa [#allocation4], 0
    %s20 = scalar_lea.sflag [#allocation4], 1
    %21 = vsyncpa %s20, 0
    loop: start=0, step=1, limit=4
    $region2: #{tpu_custom_call.1} parent=1 // loop_pre_header
      _
    $region3: #{tpu_custom_call.1} parent=1 // loop_header
      %s23 = sphi 0, %s27
      %p24 = scmp.ge.s32.totalorder %s23, 4
      %s33 = sphi 0, %s35
      %s36 = sphi 0, %s33
      %s37 = sphi 0, %s36
      %s53 = sphi 0, %s37
      %s59 = sphi 0, %s61
      %s62 = sphi 0, %s59
      %s63 = sphi 0, %s62
      %s79 = sphi 0, %s63
      %s83 = sphi 0, %s83
      %s85 = sphi 0, %s83
      %s86 = sphi 0, %s85
      %s100 = sphi 0, %s86
      %s104 = sphi 0, %s104
      %s106 = sphi 0, %s104
      %s107 = sphi 0, %s106
      %s121 = sphi 0, %s107
      %s125 = sphi 0, %s125
      %s127 = sphi 0, %s125
      %s128 = sphi 0, %s127
      %s142 = sphi 0, %s128
      %s146 = sphi 0, %s146
      %s148 = sphi 0, %s146
      %s149 = sphi 0, %s148
      %s163 = sphi 0, %s149
      %s167 = sphi 0, %s167
      %s169 = sphi 0, %s167
      %s170 = sphi 0, %s169
      %s184 = sphi 0, %s170
      %s190 = sphi 0, %s192
      %s193 = sphi 0, %s190
      %s194 = sphi 0, %s193
      %s210 = sphi 0, %s194
    $region4: #{tpu_custom_call.1} parent=1 // loop_header_branch
      %26 = sbr.rel (%p24) target = $region8
    $region5: #{tpu_custom_call.1} parent=1 // loop_body
      %s28 = ssub.s32 %s23, 1
      %s29 = ssub.s32 %s23, 2
      %s30 = sadd.s32 %s23, 1
      %s31 = ssub.s32 %s23, %s30
      %p32 = scmp.eq.s32.totalorder %s31, 0
      %s34 = sadd.s32 %s33, 1
      %s35 = scalar_select %p32, %s33, %s34
      %p38 = pneg %p32
      %p39 = scmp.eq.s32.totalorder %s23, 1
      %p40 = por %p38, %p39
      %p41 = scmp.ne.s32.totalorder %s33, %s36
      %p42 = scmp.eq.s32.totalorder %s23, 0
      %p43 = por %p41, %p42
      %p44 = scmp.ne.s32.totalorder %s33, %s36
      %p45 = scmp.eq.s32.totalorder %s28, 1
      %p46 = por %p44, %p45
      %p47 = scmp.ne.s32.totalorder %s36, %s37
      %p48 = scmp.eq.s32.totalorder %s28, 0
      %p49 = por %p47, %p48
      %p50 = scmp.ne.s32.totalorder %s36, %s37
      %p51 = scmp.eq.s32.totalorder %s29, 1
      %p52 = por %p50, %p51
      %p54 = scmp.ne.s32.totalorder %s37, %s53
      %p55 = scmp.eq.s32.totalorder %s29, 0
      %p56 = por %p54, %p55
      %s57 = ssub.s32 %s23, %s30
      %p58 = scmp.eq.s32.totalorder %s57, 0
      %s60 = sadd.s32 %s59, 1
      %s61 = scalar_select %p58, %s59, %s60
      %p64 = pneg %p58
      %p65 = scmp.eq.s32.totalorder %s23, 1
      %p66 = por %p64, %p65
      %p67 = scmp.ne.s32.totalorder %s59, %s62
      %p68 = scmp.eq.s32.totalorder %s23, 0
      %p69 = por %p67, %p68
      %p70 = scmp.ne.s32.totalorder %s59, %s62
      %p71 = scmp.eq.s32.totalorder %s28, 1
      %p72 = por %p70, %p71
      %p73 = scmp.ne.s32.totalorder %s62, %s63
      %p74 = scmp.eq.s32.totalorder %s28, 0
      %p75 = por %p73, %p74
      %p76 = scmp.ne.s32.totalorder %s62, %s63
      %p77 = scmp.eq.s32.totalorder %s29, 1
      %p78 = por %p76, %p77
      %p80 = scmp.ne.s32.totalorder %s63, %s79
      %p81 = scmp.eq.s32.totalorder %s29, 0
      %p82 = por %p80, %p81
      %s84 = sadd.s32 %s83, 1
      %p87 = scmp.eq.s32.totalorder %s23, 1
      %p88 = scmp.ne.s32.totalorder %s83, %s85
      %p89 = scmp.eq.s32.totalorder %s23, 0
      %p90 = por %p88, %p89
      %p91 = scmp.ne.s32.totalorder %s83, %s85
      %p92 = scmp.eq.s32.totalorder %s28, 1
      %p93 = por %p91, %p92
      %p94 = scmp.ne.s32.totalorder %s85, %s86
      %p95 = scmp.eq.s32.totalorder %s28, 0
      %p96 = por %p94, %p95
      %p97 = scmp.ne.s32.totalorder %s85, %s86
      %p98 = scmp.eq.s32.totalorder %s29, 1
      %p99 = por %p97, %p98
      %p101 = scmp.ne.s32.totalorder %s86, %s100
      %p102 = scmp.eq.s32.totalorder %s29, 0
      %p103 = por %p101, %p102
      %s105 = sadd.s32 %s104, 1
      %p108 = scmp.eq.s32.totalorder %s23, 1
      %p109 = scmp.ne.s32.totalorder %s104, %s106
      %p110 = scmp.eq.s32.totalorder %s23, 0
      %p111 = por %p109, %p110
      %p112 = scmp.ne.s32.totalorder %s104, %s106
      %p113 = scmp.eq.s32.totalorder %s28, 1
      %p114 = por %p112, %p113
      %p115 = scmp.ne.s32.totalorder %s106, %s107
      %p116 = scmp.eq.s32.totalorder %s28, 0
      %p117 = por %p115, %p116
      %p118 = scmp.ne.s32.totalorder %s106, %s107
      %p119 = scmp.eq.s32.totalorder %s29, 1
      %p120 = por %p118, %p119
      %p122 = scmp.ne.s32.totalorder %s107, %s121
      %p123 = scmp.eq.s32.totalorder %s29, 0
      %p124 = por %p122, %p123
      %s126 = sadd.s32 %s125, 1
      %p129 = scmp.eq.s32.totalorder %s23, 1
      %p130 = scmp.ne.s32.totalorder %s125, %s127
      %p131 = scmp.eq.s32.totalorder %s23, 0
      %p132 = por %p130, %p131
      %p133 = scmp.ne.s32.totalorder %s125, %s127
      %p134 = scmp.eq.s32.totalorder %s28, 1
      %p135 = por %p133, %p134
      %p136 = scmp.ne.s32.totalorder %s127, %s128
      %p137 = scmp.eq.s32.totalorder %s28, 0
      %p138 = por %p136, %p137
      %p139 = scmp.ne.s32.totalorder %s127, %s128
      %p140 = scmp.eq.s32.totalorder %s29, 1
      %p141 = por %p139, %p140
      %p143 = scmp.ne.s32.totalorder %s128, %s142
      %p144 = scmp.eq.s32.totalorder %s29, 0
      %p145 = por %p143, %p144
      %s147 = sadd.s32 %s146, 1
      %p150 = scmp.eq.s32.totalorder %s23, 1
      %p151 = scmp.ne.s32.totalorder %s146, %s148
      %p152 = scmp.eq.s32.totalorder %s23, 0
      %p153 = por %p151, %p152
      %p154 = scmp.ne.s32.totalorder %s146, %s148
      %p155 = scmp.eq.s32.totalorder %s28, 1
      %p156 = por %p154, %p155
      %p157 = scmp.ne.s32.totalorder %s148, %s149
      %p158 = scmp.eq.s32.totalorder %s28, 0
      %p159 = por %p157, %p158
      %p160 = scmp.ne.s32.totalorder %s148, %s149
      %p161 = scmp.eq.s32.totalorder %s29, 1
      %p162 = por %p160, %p161
      %p164 = scmp.ne.s32.totalorder %s149, %s163
      %p165 = scmp.eq.s32.totalorder %s29, 0
      %p166 = por %p164, %p165
      %s168 = sadd.s32 %s167, 1
      %p171 = scmp.eq.s32.totalorder %s23, 1
      %p172 = scmp.ne.s32.totalorder %s167, %s169
      %p173 = scmp.eq.s32.totalorder %s23, 0
      %p174 = por %p172, %p173
      %p175 = scmp.ne.s32.totalorder %s167, %s169
      %p176 = scmp.eq.s32.totalorder %s28, 1
      %p177 = por %p175, %p176
      %p178 = scmp.ne.s32.totalorder %s169, %s170
      %p179 = scmp.eq.s32.totalorder %s28, 0
      %p180 = por %p178, %p179
      %p181 = scmp.ne.s32.totalorder %s169, %s170
      %p182 = scmp.eq.s32.totalorder %s29, 1
      %p183 = por %p181, %p182
      %p185 = scmp.ne.s32.totalorder %s170, %s184
      %p186 = scmp.eq.s32.totalorder %s29, 0
      %p187 = por %p185, %p186
      %s188 = ssub.s32 %s23, %s30
      %p189 = scmp.eq.s32.totalorder %s188, 0
      %s191 = sadd.s32 %s190, 1
      %s192 = scalar_select %p189, %s190, %s191
      %p195 = pneg %p189
      %p196 = scmp.eq.s32.totalorder %s23, 1
      %p197 = por %p195, %p196
      %p198 = scmp.ne.s32.totalorder %s190, %s193
      %p199 = scmp.eq.s32.totalorder %s23, 0
      %p200 = por %p198, %p199
      %p201 = scmp.ne.s32.totalorder %s190, %s193
      %p202 = scmp.eq.s32.totalorder %s28, 1
      %p203 = por %p201, %p202
      %p204 = scmp.ne.s32.totalorder %s193, %s194
      %p205 = scmp.eq.s32.totalorder %s28, 0
      %p206 = por %p204, %p205
      %p207 = scmp.ne.s32.totalorder %s193, %s194
      %p208 = scmp.eq.s32.totalorder %s29, 1
      %p209 = por %p207, %p208
      %p211 = scmp.ne.s32.totalorder %s194, %s210
      %p212 = scmp.eq.s32.totalorder %s29, 0
      %p213 = por %p211, %p212
      %p214 = scmp.le.s32.totalorder 1, %s23
      %p215 = scmp.lt.s32.totalorder %s23, 3
      %p216 = pnand %p214, %p215
      %p217 = pneg %p216
      // Predicated region
      $region9: #{tpu_custom_call.1} parent=5 // pred_check
        _
      $region10: #{tpu_custom_call.1} parent=5 // pred_check_branch
        %219 = sbr.rel (%p216) target = $region12
      $region11: #{tpu_custom_call.1} parent=5 // pred_region
        %s220 = ssub.s32 %s23, 1
        // Predicated region
        $region13: #{tpu_custom_call.1} parent=11 // pred_check
          %p221 = pneg %p96
        $region14: #{tpu_custom_call.1} parent=11 // pred_check_branch
          %223 = sbr.rel (%p221) target = $region16
        $region15: #{tpu_custom_call.1} parent=11 // pred_region
          %s225 = ssub.s32 256, 256
          %226 = vsyncadd [#allocation6], %s225
          %s227 = sshll.u32 [#allocation7], 4
          %s228 = int_to_ptr.vmem [resolvable:$true] %s227
          %233 = dma.hbm_to_vmem [thread:$0]  %s2, 256, %s228, [#allocation6], 64, 64, 4
        $region16: #{tpu_custom_call.1} parent=11 // pred_fallthru
          _
        // Predicated region
        $region17: #{tpu_custom_call.1} parent=11 // pred_check
          %p234 = pneg %p117
        $region18: #{tpu_custom_call.1} parent=11 // pred_check_branch
          %236 = sbr.rel (%p234) target = $region20
        $region19: #{tpu_custom_call.1} parent=11 // pred_region
          %s238 = ssub.s32 1024, 1024
          %239 = vsyncadd [#allocation9], %s238
          %s240 = sshll.u32 [#allocation8], 4
          %s241 = int_to_ptr.vmem [resolvable:$true] %s240
          %246 = dma.hbm_to_vmem [thread:$0]  %s3, 1024, %s241, [#allocation9], 64, 64, 4
        $region20: #{tpu_custom_call.1} parent=11 // pred_fallthru
          _
        // Predicated region
        $region21: #{tpu_custom_call.1} parent=11 // pred_check
          %p247 = pneg %p138
        $region22: #{tpu_custom_call.1} parent=11 // pred_check_branch
          %249 = sbr.rel (%p247) target = $region24
        $region23: #{tpu_custom_call.1} parent=11 // pred_region
          _
        $region24: #{tpu_custom_call.1} parent=11 // pred_fallthru
          _
        // Predicated region
        $region25: #{tpu_custom_call.1} parent=11 // pred_check
          %p250 = pneg %p159
        $region26: #{tpu_custom_call.1} parent=11 // pred_check_branch
          %252 = sbr.rel (%p250) target = $region28
        $region27: #{tpu_custom_call.1} parent=11 // pred_region
          %s254 = ssub.s32 1024, 1024
          %255 = vsyncadd [#allocation9], %s254
          %s256 = sshll.u32 [#allocation10], 4
          %s257 = int_to_ptr.vmem [resolvable:$true] %s256
          %262 = dma.hbm_to_vmem [thread:$0]  %s5, 1024, %s257, [#allocation9], 64, 64, 4
        $region28: #{tpu_custom_call.1} parent=11 // pred_fallthru
          _
        // Predicated region
        $region29: #{tpu_custom_call.1} parent=11 // pred_check
          %p263 = pneg %p180
        $region30: #{tpu_custom_call.1} parent=11 // pred_check_branch
          %265 = sbr.rel (%p263) target = $region32
        $region31: #{tpu_custom_call.1} parent=11 // pred_region
          _
        $region32: #{tpu_custom_call.1} parent=11 // pred_fallthru
          _
      $region12: #{tpu_custom_call.1} parent=5 // pred_fallthru
        _
      %p266 = scmp.lt.s32.totalorder %s23, 2
      // Predicated region
      $region33: #{tpu_custom_call.1} parent=5 // pred_check
        %p267 = pneg %p266
      $region34: #{tpu_custom_call.1} parent=5 // pred_check_branch
        %269 = sbr.rel (%p267) target = $region36
      $region35: #{tpu_custom_call.1} parent=5 // pred_region
        // Predicated region
        $region37: #{tpu_custom_call.1} parent=35 // pred_check
          %p270 = pneg %p43
        $region38: #{tpu_custom_call.1} parent=35 // pred_check_branch
          %272 = sbr.rel (%p270) target = $region40
        $region39: #{tpu_custom_call.1} parent=35 // pred_region
          %s273 = sand.u32 %s33, 1
          %s274 = scalar_lea.sflag [#allocation3], %s273
          %s275 = sand.u32 %s33, 1
          %s276 = smul.addr %s275, 8
          %s277 = scalar_lea.vmem [#allocation2], %s276
          %s279 = ssub.s32 128, 128
          %280 = vsyncadd %s274, %s279
          %s281 = smul.addr %s23, 128
          %s282 = scalar_lea.hbm %s0, %s281
          %s284 = sshll.u32 %s277, 4
          %s285 = int_to_ptr.vmem [resolvable:$true] %s284
          %287 = dma.hbm_to_vmem [thread:$0]  %s282, 128, %s285, %s274
        $region40: #{tpu_custom_call.1} parent=35 // pred_fallthru
          _
        // Predicated region
        $region41: #{tpu_custom_call.1} parent=35 // pred_check
          %p288 = pneg %p69
        $region42: #{tpu_custom_call.1} parent=35 // pred_check_branch
          %290 = sbr.rel (%p288) target = $region44
        $region43: #{tpu_custom_call.1} parent=35 // pred_region
          %s291 = sand.u32 %s23, 1
          %s292 = scalar_lea.sflag [#allocation6], %s291
          %s293 = sand.u32 %s59, 1
          %s294 = smul.addr %s293, 8
          %s295 = scalar_lea.vmem [#allocation5], %s294
          %s297 = ssub.s32 128, 128
          %298 = vsyncadd %s292, %s297
          %s299 = smul.addr %s23, 128
          %s300 = scalar_lea.hbm %s1, %s299
          %s302 = sshll.u32 %s295, 4
          %s303 = int_to_ptr.vmem [resolvable:$true] %s302
          %305 = dma.hbm_to_vmem [thread:$0]  %s300, 128, %s303, %s292
        $region44: #{tpu_custom_call.1} parent=35 // pred_fallthru
          _
      $region36: #{tpu_custom_call.1} parent=5 // pred_fallthru
        _
      %p306 = scmp.le.s32.totalorder 1, %s23
      %p307 = scmp.lt.s32.totalorder %s23, 3
      %p308 = pnand %p306, %p307
      %p309 = pneg %p308
      // Predicated region
      $region45: #{tpu_custom_call.1} parent=5 // pred_check
        _
      $region46: #{tpu_custom_call.1} parent=5 // pred_check_branch
        %311 = sbr.rel (%p308) target = $region48
      $region47: #{tpu_custom_call.1} parent=5 // pred_region
        %s312 = ssub.s32 %s23, 1
        %s313 = sand.u32 %s36, 1
        %s314 = scalar_lea.sflag [#allocation3], %s313
        %s315 = sand.u32 %s36, 1
        %s316 = smul.addr %s315, 8
        %s317 = scalar_lea.vmem [#allocation2], %s316
        // Predicated region
        $region49: #{tpu_custom_call.1} parent=47 // pred_check
          %p318 = pneg %p49
        $region50: #{tpu_custom_call.1} parent=47 // pred_check_branch
          %320 = sbr.rel (%p318) target = $region52
        $region51: #{tpu_custom_call.1} parent=47 // pred_region
          %321 = dma.done %s314, 128
        $region52: #{tpu_custom_call.1} parent=47 // pred_fallthru
          _
        %s322 = sand.u32 %s28, 1
        %s323 = scalar_lea.sflag [#allocation6], %s322
        %s324 = sand.u32 %s62, 1
        %s325 = smul.addr %s324, 8
        %s326 = scalar_lea.vmem [#allocation5], %s325
        // Predicated region
        $region53: #{tpu_custom_call.1} parent=47 // pred_check
          %p327 = pneg %p75
        $region54: #{tpu_custom_call.1} parent=47 // pred_check_branch
          %329 = sbr.rel (%p327) target = $region56
        $region55: #{tpu_custom_call.1} parent=47 // pred_region
          %330 = dma.done %s323, 128
        $region56: #{tpu_custom_call.1} parent=47 // pred_fallthru
          _
        // Predicated region
        $region57: #{tpu_custom_call.1} parent=47 // pred_check
          %p331 = pneg %p96
        $region58: #{tpu_custom_call.1} parent=47 // pred_check_branch
          %333 = sbr.rel (%p331) target = $region60
        $region59: #{tpu_custom_call.1} parent=47 // pred_region
          %334 = dma.done [#allocation6], 256
        $region60: #{tpu_custom_call.1} parent=47 // pred_fallthru
          _
        // Predicated region
        $region61: #{tpu_custom_call.1} parent=47 // pred_check
          %p335 = pneg %p117
        $region62: #{tpu_custom_call.1} parent=47 // pred_check_branch
          %337 = sbr.rel (%p335) target = $region64
        $region63: #{tpu_custom_call.1} parent=47 // pred_region
          %338 = dma.done [#allocation9], 1024
        $region64: #{tpu_custom_call.1} parent=47 // pred_fallthru
          _
        // Predicated region
        $region65: #{tpu_custom_call.1} parent=47 // pred_check
          %p339 = pneg %p159
        $region66: #{tpu_custom_call.1} parent=47 // pred_check_branch
          %341 = sbr.rel (%p339) target = $region68
        $region67: #{tpu_custom_call.1} parent=47 // pred_region
          %342 = dma.done [#allocation9], 1024
        $region68: #{tpu_custom_call.1} parent=47 // pred_fallthru
          _
        %s343 = sand.u32 %s36, 1
        %s344 = scalar_lea.sflag [#allocation3], %s343
        %s345 = sand.u32 %s36, 1
        %s346 = smul.addr %s345, 8
        %s347 = scalar_lea.vmem [#allocation2], %s346
        %p348 = pneg %p49
        %p349 = pneg %p46
        %s350 = sand.u32 %s28, 1
        %s351 = scalar_lea.sflag [#allocation6], %s350
        %s352 = sand.u32 %s62, 1
        %s353 = smul.addr %s352, 8
        %s354 = scalar_lea.vmem [#allocation5], %s353
        %p355 = pneg %p75
        %p356 = pneg %p72
        %p357 = pneg %p96
        %p358 = pneg %p93
        %p359 = pneg %p117
        %p360 = pneg %p114
        %p361 = pneg %p138
        %p362 = pneg %p135
        %p363 = pneg %p159
        %p364 = pneg %p156
        %p365 = pneg %p180
        %p366 = pneg %p177
        %p367 = pneg %p206
        %p368 = pneg %p203
        %s369 = sand.u32 %s193, 1
        %s370 = scalar_lea.sflag [#allocation4], %s369
        %s371 = sand.u32 %s193, 1
        %s372 = smul.addr %s371, 8
        %s373 = scalar_lea.vmem [#allocation11], %s372
        %v375 = vld [vmem:[%s317] sm:$0xff]
        %v376 = vpack.c.bf16 %v375, %v375
        %v377 = vld [vmem:[#allocation7] sm:$0xf]
        %v378 = vld [vmem:[#allocation7 + $0x4] sm:$0xf]
        %v379 = vld [vmem:[#allocation7 + $0x8] sm:$0xf]
        %v380 = vld [vmem:[#allocation7 + $0xc] sm:$0xf]
        %v381 = vld [vmem:[%s326] sm:$0xff]
        %v382 = vpack.c.bf16 %v381, %v381
        %v383 = vld [vmem:[#allocation8] sm:$0xf]
        %v384 = vld [vmem:[#allocation8 + $0x4] sm:$0xf]
        %v385 = vld [vmem:[#allocation8 + $0x8] sm:$0xf]
        %v386 = vld [vmem:[#allocation8 + $0xc] sm:$0xf]
        %v387 = vld [vmem:[#allocation8 + $0x10] sm:$0xf]
        %v388 = vld [vmem:[#allocation8 + $0x14] sm:$0xf]
        %v389 = vld [vmem:[#allocation8 + $0x18] sm:$0xf]
        %v390 = vld [vmem:[#allocation8 + $0x1c] sm:$0xf]
        %v391 = vld [vmem:[#allocation8 + $0x20] sm:$0xf]
        %v392 = vld [vmem:[#allocation8 + $0x24] sm:$0xf]
        %v393 = vld [vmem:[#allocation8 + $0x28] sm:$0xf]
        %v394 = vld [vmem:[#allocation8 + $0x2c] sm:$0xf]
        %v395 = vld [vmem:[#allocation8 + $0x30] sm:$0xf]
        %v396 = vld [vmem:[#allocation8 + $0x34] sm:$0xf]
        %v397 = vld [vmem:[#allocation8 + $0x38] sm:$0xf]
        %v398 = vld [vmem:[#allocation8 + $0x3c] sm:$0xf]
        %v415 = vunpack.c.l.b16 %v383
        %v416 = vunpack.c.l.b16 %v384
        %v417 = vunpack.c.l.b16 %v385
        %v418 = vunpack.c.l.b16 %v386
        %v419 = vunpack.c.l.b16 %v387
        %v420 = vunpack.c.l.b16 %v388
        %v421 = vunpack.c.l.b16 %v389
        %v422 = vunpack.c.l.b16 %v390
        %v423 = vunpack.c.l.b16 %v391
        %v424 = vunpack.c.l.b16 %v392
        %v425 = vunpack.c.l.b16 %v393
        %v426 = vunpack.c.l.b16 %v394
        %v427 = vunpack.c.l.b16 %v395
        %v428 = vunpack.c.l.b16 %v396
        %v429 = vunpack.c.l.b16 %v397
        %v430 = vunpack.c.l.b16 %v398
        %v431 = vpack.c.b16 %v416, %v415
        %v432 = vpack.c.b16 %v418, %v417
        %v433 = vpack.c.b16 %v420, %v419
        %v434 = vpack.c.b16 %v422, %v421
        %v435 = vpack.c.b16 %v424, %v423
        %v436 = vpack.c.b16 %v426, %v425
        %v437 = vpack.c.b16 %v428, %v427
        %v438 = vpack.c.b16 %v430, %v429
        %447 = vmatprep.subr.bf16.mxu0 0
        %448 = vmatpush1.bf16.msra.mxu0 %v431
        %449 = vmatprep.subr.bf16.mxu0 0
        %450 = vmatpush1.bf16.msra.mxu0 %v432
        %451 = vmatprep.subr.bf16.mxu0 0
        %452 = vmatpush1.bf16.msra.mxu0 %v433
        %453 = vmatprep.subr.bf16.mxu0 0
        %454 = vmatpush1.bf16.msra.mxu0 %v434
        %455 = vmatprep.subr.bf16.mxu0 0
        %456 = vmatpush1.bf16.msra.mxu0 %v435
        %457 = vmatprep.subr.bf16.mxu0 0
        %458 = vmatpush1.bf16.msra.mxu0 %v436
        %459 = vmatprep.subr.bf16.mxu0 0
        %460 = vmatpush1.bf16.msra.mxu0 %v437
        %461 = vmatprep.subr.bf16.mxu0 0
        %462 = vmatpush1.bf16.msra.mxu0 %v438
        %463 = vmatprep.subr.bf16.mxu0 0
        %464 = vmatpush1.bf16.msra.mxu0 0
        %465 = vmatprep.subr.bf16.mxu0 0
        %466 = vmatpush1.bf16.msra.mxu0 0
        %467 = vmatprep.subr.bf16.mxu0 0
        %468 = vmatpush1.bf16.msra.mxu0 0
        %469 = vmatprep.subr.bf16.mxu0 0
        %470 = vmatpush1.bf16.msra.mxu0 0
        %471 = vmatprep.subr.bf16.mxu0 0
        %472 = vmatpush1.bf16.msra.mxu0 0
        %473 = vmatprep.subr.bf16.mxu0 0
        %474 = vmatpush1.bf16.msra.mxu0 0
        %475 = vmatprep.subr.bf16.mxu0 0
        %476 = vmatpush1.bf16.msra.mxu0 0
        %477 = vmatprep.subr.bf16.mxu0 0
        %478 = vmatpush1.bf16.msra.mxu0 0
        %479 = vmatprep.mubr.bf16.mxu0 0
        %480 = vmatmul.mubr.bf16.gmra.mrb[0].mxu0 %v382
        %v481 = vpop.f32.mrb[0].mxu0
        %v482 = vadd.f32 0.0, %v481
        %v483 = vpop.f32.mrb[0].mxu0
        %v484 = vpop.f32.mrb[0].mxu0
        %v485 = vpop.f32.mrb[0].mxu0
        %486 = vdwg.mxu0
        %v491 = vunpack.c.l.b16 %v377
        %v492 = vunpack.c.l.b16 %v378
        %v493 = vunpack.c.l.b16 %v379
        %v494 = vunpack.c.l.b16 %v380
        %v495 = vpack.c.b16 %v492, %v491
        %v496 = vpack.c.b16 %v494, %v493
        %vm499 = vcmask 261120
        %v501 = vsel %vm499, %v376, 0
        %503 = vmatprep.subr.bf16.mxu0 0
        %504 = vmatpush1.bf16.msra.mxu0 %v495
        %505 = vmatprep.subr.bf16.mxu0 0
        %506 = vmatpush1.bf16.msra.mxu0 %v496
        %507 = vmatprep.subr.bf16.mxu0 0
        %508 = vmatpush1.bf16.msra.mxu0 0
        %509 = vmatprep.subr.bf16.mxu0 0
        %510 = vmatpush1.bf16.msra.mxu0 0
        %511 = vmatprep.subr.bf16.mxu0 0
        %512 = vmatpush1.bf16.msra.mxu0 0
        %513 = vmatprep.subr.bf16.mxu0 0
        %514 = vmatpush1.bf16.msra.mxu0 0
        %515 = vmatprep.subr.bf16.mxu0 0
        %516 = vmatpush1.bf16.msra.mxu0 0
        %517 = vmatprep.subr.bf16.mxu0 0
        %518 = vmatpush1.bf16.msra.mxu0 0
        %519 = vmatprep.subr.bf16.mxu0 0
        %520 = vmatpush1.bf16.msra.mxu0 0
        %521 = vmatprep.subr.bf16.mxu0 0
        %522 = vmatpush1.bf16.msra.mxu0 0
        %523 = vmatprep.subr.bf16.mxu0 0
        %524 = vmatpush1.bf16.msra.mxu0 0
        %525 = vmatprep.subr.bf16.mxu0 0
        %526 = vmatpush1.bf16.msra.mxu0 0
        %527 = vmatprep.subr.bf16.mxu0 0
        %528 = vmatpush1.bf16.msra.mxu0 0
        %529 = vmatprep.subr.bf16.mxu0 0
        %530 = vmatpush1.bf16.msra.mxu0 0
        %531 = vmatprep.subr.bf16.mxu0 0
        %532 = vmatpush1.bf16.msra.mxu0 0
        %533 = vmatprep.subr.bf16.mxu0 0
        %534 = vmatpush1.bf16.msra.mxu0 0
        %535 = vmatprep.mubr.bf16.mxu0 0
        %536 = vmatmul.mubr.bf16.gmra.mrb[0].mxu0 %v501
        %v537 = vpop.f32.mrb[0].mxu0
        %v538 = vadd.f32 %v482, %v537
        %v539 = vpop.f32.mrb[0].mxu0
        %v540 = vpop.f32.mrb[0].mxu0
        %v541 = vpop.f32.mrb[0].mxu0
        %542 = vdwg.mxu0
        %v543 = vld [vmem:[%s4] sm:$0x1]
        %v545 = vlaneseq
        %v546 = vshrl.u32 %v545, 7
        %v547 = vsub.s32 0, %v546
        %v548 = vrot.slane %v543, %v547
        %v550 = vadd.f32 %v538, %v548
        %v551 = vmax.f32 %v550, 0.0
        %v552 = vpack.c.bf16 %v551, %v551
        %v553 = vld [vmem:[#allocation10] sm:$0xf]
        %v554 = vld [vmem:[#allocation10 + $0x4] sm:$0xf]
        %v555 = vld [vmem:[#allocation10 + $0x8] sm:$0xf]
        %v556 = vld [vmem:[#allocation10 + $0xc] sm:$0xf]
        %v557 = vld [vmem:[#allocation10 + $0x10] sm:$0xf]
        %v558 = vld [vmem:[#allocation10 + $0x14] sm:$0xf]
        %v559 = vld [vmem:[#allocation10 + $0x18] sm:$0xf]
        %v560 = vld [vmem:[#allocation10 + $0x1c] sm:$0xf]
        %v561 = vld [vmem:[#allocation10 + $0x20] sm:$0xf]
        %v562 = vld [vmem:[#allocation10 + $0x24] sm:$0xf]
        %v563 = vld [vmem:[#allocation10 + $0x28] sm:$0xf]
        %v564 = vld [vmem:[#allocation10 + $0x2c] sm:$0xf]
        %v565 = vld [vmem:[#allocation10 + $0x30] sm:$0xf]
        %v566 = vld [vmem:[#allocation10 + $0x34] sm:$0xf]
        %v567 = vld [vmem:[#allocation10 + $0x38] sm:$0xf]
        %v568 = vld [vmem:[#allocation10 + $0x3c] sm:$0xf]
        %v569 = vld [vmem:[%s6] sm:$0x1]
        %v571 = vlaneseq
        %v572 = vshrl.u32 %v571, 7
        %v573 = vsub.s32 0, %v572
        %v574 = vrot.slane %v569, %v573
        %v592 = vunpack.c.l.b16 %v553
        %v593 = vunpack.c.l.b16 %v554
        %v594 = vunpack.c.l.b16 %v555
        %v595 = vunpack.c.l.b16 %v556
        %v596 = vunpack.c.l.b16 %v557
        %v597 = vunpack.c.l.b16 %v558
        %v598 = vunpack.c.l.b16 %v559
        %v599 = vunpack.c.l.b16 %v560
        %v600 = vunpack.c.l.b16 %v561
        %v601 = vunpack.c.l.b16 %v562
        %v602 = vunpack.c.l.b16 %v563
        %v603 = vunpack.c.l.b16 %v564
        %v604 = vunpack.c.l.b16 %v565
        %v605 = vunpack.c.l.b16 %v566
        %v606 = vunpack.c.l.b16 %v567
        %v607 = vunpack.c.l.b16 %v568
        %v608 = vpack.c.b16 %v593, %v592
        %v609 = vpack.c.b16 %v595, %v594
        %v610 = vpack.c.b16 %v597, %v596
        %v611 = vpack.c.b16 %v599, %v598
        %v612 = vpack.c.b16 %v601, %v600
        %v613 = vpack.c.b16 %v603, %v602
        %v614 = vpack.c.b16 %v605, %v604
        %v615 = vpack.c.b16 %v607, %v606
        %624 = vmatprep.subr.bf16.mxu0 0
        %625 = vmatpush1.bf16.msra.mxu0 %v608
        %626 = vmatprep.subr.bf16.mxu0 0
        %627 = vmatpush1.bf16.msra.mxu0 %v609
        %628 = vmatprep.subr.bf16.mxu0 0
        %629 = vmatpush1.bf16.msra.mxu0 %v610
        %630 = vmatprep.subr.bf16.mxu0 0
        %631 = vmatpush1.bf16.msra.mxu0 %v611
        %632 = vmatprep.subr.bf16.mxu0 0
        %633 = vmatpush1.bf16.msra.mxu0 %v612
        %634 = vmatprep.subr.bf16.mxu0 0
        %635 = vmatpush1.bf16.msra.mxu0 %v613
        %636 = vmatprep.subr.bf16.mxu0 0
        %637 = vmatpush1.bf16.msra.mxu0 %v614
        %638 = vmatprep.subr.bf16.mxu0 0
        %639 = vmatpush1.bf16.msra.mxu0 %v615
        %640 = vmatprep.subr.bf16.mxu0 0
        %641 = vmatpush1.bf16.msra.mxu0 0
        %642 = vmatprep.subr.bf16.mxu0 0
        %643 = vmatpush1.bf16.msra.mxu0 0
        %644 = vmatprep.subr.bf16.mxu0 0
        %645 = vmatpush1.bf16.msra.mxu0 0
        %646 = vmatprep.subr.bf16.mxu0 0
        %647 = vmatpush1.bf16.msra.mxu0 0
        %648 = vmatprep.subr.bf16.mxu0 0
        %649 = vmatpush1.bf16.msra.mxu0 0
        %650 = vmatprep.subr.bf16.mxu0 0
        %651 = vmatpush1.bf16.msra.mxu0 0
        %652 = vmatprep.subr.bf16.mxu0 0
        %653 = vmatpush1.bf16.msra.mxu0 0
        %654 = vmatprep.subr.bf16.mxu0 0
        %655 = vmatpush1.bf16.msra.mxu0 0
        %656 = vmatprep.mubr.bf16.mxu0 0
        %657 = vmatmul.mubr.bf16.gmra.mrb[0].mxu0 %v552
        %v658 = vpop.f32.mrb[0].mxu0
        %v659 = vadd.f32 %v574, %v658
        %v660 = vpop.f32.mrb[0].mxu0
        %v661 = vpop.f32.mrb[0].mxu0
        %v662 = vpop.f32.mrb[0].mxu0
        %663 = vdwg.mxu0
        %664 = vmax.xlane.f32.xlu0 %v659
        %v665 = vpop.xlane.xlu0 %664
        %v666 = vsub.f32 %v659, %v665
        %v667 = vmul.f32 %v666, 1.442695
        %v668 = vpow.pop %v667
        %669 = vadd.xlane.f32.xlu0 %v668
        %v670 = vpop.xlane.xlu0 %669
        %v671 = vlog2.pop %v670
        %v672 = vmul.f32 %v671, 0.6931472
        %v673 = vsub.f32 %v666, %v672
        %674 = vst [vmem:[%s373] sm:$0xff] %v673
        %s675 = sand.u32 %s193, 1
        %s676 = scalar_lea.sflag [#allocation4], %s675
        %s677 = sand.u32 %s193, 1
        %s678 = smul.addr %s677, 8
        %s679 = scalar_lea.vmem [#allocation11], %s678
        // Predicated region
        $region69: #{tpu_custom_call.1} parent=47 // pred_check
          %p680 = pneg %p203
        $region70: #{tpu_custom_call.1} parent=47 // pred_check_branch
          %682 = sbr.rel (%p680) target = $region72
        $region71: #{tpu_custom_call.1} parent=47 // pred_region
          %s684 = ssub.s32 128, 128
          %685 = vsyncadd %s676, %s684
          %s686 = smul.addr %s28, 128
          %s687 = scalar_lea.hbm %s7, %s686
          %s689 = sshll.u32 %s679, 4
          %s690 = int_to_ptr.vmem [resolvable:$true] %s689
          %692 = dma.vmem_to_hbm [thread:$0]  %s690, 128, %s687, %s676
        $region72: #{tpu_custom_call.1} parent=47 // pred_fallthru
          _
      $region48: #{tpu_custom_call.1} parent=5 // pred_fallthru
        _
      %p693 = scmp.le.s32.totalorder 2, %s23
      // Predicated region
      $region73: #{tpu_custom_call.1} parent=5 // pred_check
        %p694 = pneg %p693
      $region74: #{tpu_custom_call.1} parent=5 // pred_check_branch
        %696 = sbr.rel (%p694) target = $region76
      $region75: #{tpu_custom_call.1} parent=5 // pred_region
        %s697 = ssub.s32 %s23, 2
        // Predicated region
        $region77: #{tpu_custom_call.1} parent=75 // pred_check
          %p698 = pneg %p209
        $region78: #{tpu_custom_call.1} parent=75 // pred_check_branch
          %700 = sbr.rel (%p698) target = $region80
        $region79: #{tpu_custom_call.1} parent=75 // pred_region
          %s701 = sand.u32 %s194, 1
          %s702 = scalar_lea.sflag [#allocation4], %s701
          %s703 = sand.u32 %s194, 1
          %s704 = smul.addr %s703, 8
          %s705 = scalar_lea.vmem [#allocation11], %s704
          %706 = dma.done %s702, 128
        $region80: #{tpu_custom_call.1} parent=75 // pred_fallthru
          _
      $region76: #{tpu_custom_call.1} parent=5 // pred_fallthru
        _
    $region6: #{tpu_custom_call.1} parent=1 // loop_footer
      %s27 = sadd.s32 1, %s23
    $region7: #{tpu_custom_call.1} parent=1 // loop_footer_branch
      %22 = sbr.rel target = $region3
    $region8: #{tpu_custom_call.1} parent=1 // loop_exit
      _
    %707 = vsyncpa [#allocation3], 1
    %s708 = scalar_lea.sflag [#allocation3], 1
    %709 = vsyncpa %s708, 1
    %710 = vsyncpa [#allocation6], 1
    %s711 = scalar_lea.sflag [#allocation6], 1
    %712 = vsyncpa %s711, 1
    %713 = vsyncpa [#allocation9], 1
    %714 = vsyncpa [#allocation4], 1
    %s715 = scalar_lea.sflag [#allocation4], 1
    %716 = vsyncpa %s715, 1

</llo_original>
